<compile_context>
chip_gen: v6e
topology: v6e:2x2x1
jax: 0.10.0
libtpu: 0.0.40
codegen_flags: <defaults>
</compile_context>

<pallas_src>
import jax
import jax.numpy as jnp
from jax.experimental import pallas as pl
from jax.experimental.pallas import tpu as pltpu


_LANE = 128
_SUBLANE_BF16 = 16        # bf16 packs 16 rows per vreg sublane group
_MAX_BATCH_TILE = 256     # sweet spot: fills MXU passes without f32-acc spills
_NEG_FILL = -1e30         # acts as -inf for log-softmax masking without inf/NaN


def mlp_kernel(x_ref,
               w1_ref, b1_ref,
               w2_ref, b2_ref,
               w3_ref, b3_ref,
               w4_ref, b4_ref,
               w5_ref, b5_ref,
               out_ref):
    """Whole forward pass (5 matmuls, ReLU, log-softmax) on one batch tile."""

    def hidden_layer(h_bf16, w_ref, b_ref):
        # bf16 MXU matmul with f32 accumulation; bias + ReLU in f32.
        a = jnp.dot(h_bf16, w_ref[...], preferred_element_type=jnp.float32)
        return jnp.maximum(a + b_ref[...], 0.0)

    h = x_ref[...]                                          # bf16 (cast in wrapper)
    h = hidden_layer(h, w1_ref, b1_ref).astype(jnp.bfloat16)
    h = hidden_layer(h, w2_ref, b2_ref).astype(jnp.bfloat16)
    h = hidden_layer(h, w3_ref, b3_ref).astype(jnp.bfloat16)
    h = hidden_layer(h, w4_ref, b4_ref).astype(jnp.bfloat16)

    # Final linear layer (no ReLU). Padded output lanes have zero weight columns
    # and a -1e30 bias, so they behave as -inf in the log-softmax below.
    logits = jnp.dot(h, w5_ref[...], preferred_element_type=jnp.float32) + b5_ref[...]

    # LogSoftmax(dim=1), numerically stable, on a full 128-lane-dense tile.
    m = jnp.max(logits, axis=1, keepdims=True)
    shifted = logits - m
    lse = jnp.log(jnp.sum(jnp.exp(shifted), axis=1, keepdims=True))
    out_ref[...] = (shifted - lse).astype(out_ref.dtype)


def _round_up(n, m):
    return ((n + m - 1) // m) * m


def _prepare_params(params, d_in_pad):
    """Zero-pad each layer's input/output dims to multiples of 128 lanes; pad the
    final bias lanes with -1e30 so padded logits vanish under log-softmax.
    Weights are cast to bf16 for the MXU; biases stay f32. (Do this once.)"""
    prepared = []
    prev_out_pad = d_in_pad   # input feature dim, padded to 128 lanes
    for i, (w, b) in enumerate(params):
        k, n = w.shape
        k_pad, n_pad = prev_out_pad, _round_up(n, _LANE)
        w_p = jnp.zeros((k_pad, n_pad), jnp.float32).at[:k, :n].set(w)
        fill = 0.0 if i < len(params) - 1 else _NEG_FILL
        b_p = jnp.full((1, n_pad), fill, jnp.float32).at[:, :n].set(b.reshape(1, n))
        prepared.append((w_p.astype(jnp.bfloat16), b_p))
        prev_out_pad = n_pad
    return prepared


def _pick_batch_tile(B):
    """One large tile for small/medium batches; only split when every grid step
    still gets a full 256-row tile.  Always a multiple of 16 (bf16 packing)."""
    b16 = _round_up(B, _SUBLANE_BF16)
    return b16 if b16 <= _MAX_BATCH_TILE else _MAX_BATCH_TILE


def mnist_model_forward(x, params, *, batch_tile=None):
    """x: (B, input_size) float32; params: list of (W (in,out), b (1,out)) float32."""
    B, d_in = x.shape
    out_dim = params[-1][0].shape[1]

    d_in_pad = _round_up(d_in, _LANE)
    prepared = _prepare_params(params, d_in_pad)
    n_out_pad = prepared[-1][0].shape[1]

    bm = _pick_batch_tile(B) if batch_tile is None else batch_tile
    bm = _round_up(bm, _SUBLANE_BF16)
    B_pad = _round_up(B, bm)          # pad batch up instead of asserting

    # Zero-pad x to (B_pad, d_in_pad) and cast to bf16 (lane-dense load, half DMA).
    x_p = jnp.zeros((B_pad, d_in_pad), jnp.bfloat16)
    x_p = x_p.at[:B, :d_in].set(x.astype(jnp.bfloat16))

    flat = []
    for w, b in prepared:
        flat.extend([w, b])

    # Batch tiled over a parallel grid; weights/biases are whole-array blocks with
    # a constant index_map (VMEM-resident across all grid steps) and are single-
    # buffered — there is nothing to prefetch for grid-invariant operands.
    x_spec = pl.BlockSpec((bm, d_in_pad), lambda i: (i, 0))
    param_specs = []
    for w, b in prepared:
        param_specs.append(
            pl.BlockSpec(w.shape, lambda i: (0, 0), pipeline_mode=pl.Buffered(1)))
        param_specs.append(
            pl.BlockSpec(b.shape, lambda i: (0, 0), pipeline_mode=pl.Buffered(1)))
    out_spec = pl.BlockSpec((bm, n_out_pad), lambda i: (i, 0))

    flops = 2 * B_pad * sum(w.shape[0] * w.shape[1] for w, _ in prepared)
    bytes_accessed = (
        x_p.size * 2
        + sum(w.size * 2 + b.size * 4 for w, b in prepared)
        + B_pad * n_out_pad * 4)
    cost = pl.CostEstimate(flops=flops,
                           transcendentals=B_pad * n_out_pad,
                           bytes_accessed=bytes_accessed)

    out_padded = pl.pallas_call(
        mlp_kernel,
        out_shape=jax.ShapeDtypeStruct((B_pad, n_out_pad), jnp.float32),
        grid_spec=pltpu.PrefetchScalarGridSpec(
            num_scalar_prefetch=0,
            grid=(B_pad // bm,),
            in_specs=[x_spec] + param_specs,
            out_specs=out_spec,
        ),
        compiler_params=pltpu.CompilerParams(
            dimension_semantics=("parallel",)),
        cost_estimate=cost,
    )(x_p, *flat)

    # Drop batch and lane padding: valid rows/classes are the leading B/out_dim.
    return out_padded[:B, :out_dim]


def init_params(key, input_size, hidden_sizes, output_size):
    """PyTorch-style (uniform +-1/sqrt(fan_in)) init; W stored as (in, out)."""
    sizes = [input_size] + list(hidden_sizes) + [output_size]
    params = []
    for i in range(len(sizes) - 1):
        fan_in, fan_out = sizes[i], sizes[i + 1]
        key, kw, kb = jax.random.split(key, 3)
        bound = 1.0 / jnp.sqrt(fan_in)
        w = jax.random.uniform(kw, (fan_in, fan_out), jnp.float32, -bound, bound)
        b = jax.random.uniform(kb, (1, fan_out), jnp.float32, -bound, bound)
        params.append((w, b))
    return params


def reference_forward(x, params, matmul_dtype=jnp.float32):
    h = x
    for i, (w, b) in enumerate(params):
        h = jnp.dot(h.astype(matmul_dtype), w.astype(matmul_dtype),
                    preferred_element_type=jnp.float32) + b
        if i < len(params) - 1:
            h = jnp.maximum(h, 0.0)
    return jax.nn.log_softmax(h, axis=1)


if __name__ == "__main__":
    # Small, module-consistent shapes. batch=16 -> a single 16-row grid step
    # (no artificial splitting); input 64 is padded to 128 lanes in the wrapper.
    batch = 16
    input_size = 64
    hidden_sizes = [32, 32, 32, 32]
    output_size = 10

    key = jax.random.PRNGKey(0)
    key, kx = jax.random.split(key)
    x = jax.random.normal(kx, (batch, input_size), jnp.float32)
    params = init_params(key, input_size, hidden_sizes, output_size)

    out = mnist_model_forward(x, params)
    out = jax.block_until_ready(out)

    assert out.shape == (batch, output_size)
    assert bool(jnp.all(jnp.isfinite(out)))

    # Kernel uses bf16 matmul inputs with f32 accumulation: compare tightly against
    # a bf16-matched reference and loosely against pure-f32 module semantics.
    ref_bf16 = reference_forward(x, params, jnp.bfloat16)
    ref_f32 = reference_forward(x, params, jnp.float32)
    assert jnp.allclose(out, ref_bf16, atol=2e-3, rtol=2e-3), "mismatch vs bf16 reference"
    assert jnp.allclose(out, ref_f32, atol=5e-2, rtol=5e-2), "mismatch vs f32 reference"

    # Exercise the non-multiple-of-16 batch path (padded up instead of asserting).
    x_odd = x[:13]
    out_odd = jax.block_until_ready(mnist_model_forward(x_odd, params))
    assert out_odd.shape == (13, output_size)
    assert jnp.allclose(out_odd, reference_forward(x_odd, params, jnp.bfloat16),
                        atol=2e-3, rtol=2e-3), "mismatch on padded-batch path"

    print("KERNEL_OK")
</pallas_src>

<mosaic_0001>
module attributes {stable_mosaic.version = 11 : i64} {
  func.func @mlp_kernel(%arg0: i32, %arg1: memref<16x128xbf16, #tpu.memory_space<vmem>>, %arg2: memref<128x128xbf16, #tpu.memory_space<vmem>>, %arg3: memref<1x128xf32, #tpu.memory_space<vmem>>, %arg4: memref<128x128xbf16, #tpu.memory_space<vmem>>, %arg5: memref<1x128xf32, #tpu.memory_space<vmem>>, %arg6: memref<128x128xbf16, #tpu.memory_space<vmem>>, %arg7: memref<1x128xf32, #tpu.memory_space<vmem>>, %arg8: memref<128x128xbf16, #tpu.memory_space<vmem>>, %arg9: memref<1x128xf32, #tpu.memory_space<vmem>>, %arg10: memref<128x128xbf16, #tpu.memory_space<vmem>>, %arg11: memref<1x128xf32, #tpu.memory_space<vmem>>, %arg12: memref<16x128xf32, #tpu.memory_space<vmem>>) attributes {dimension_semantics = [#tpu.dimension_semantics<parallel>], iteration_bounds = array<i64: 1>, scalar_prefetch = 0 : i64, scratch_operands = 0 : i64, tpu.core_type = #tpu.core_type<tc>, window_params = [{transform_indices = @transform_0, window_bounds = array<i64: 16, 128>}, {pipeline_mode = #tpu.pipeline_mode<synchronous>, transform_indices = @transform_1, window_bounds = array<i64: 128, 128>}, {pipeline_mode = #tpu.pipeline_mode<synchronous>, transform_indices = @transform_2, window_bounds = array<i64: 1, 128>}, {pipeline_mode = #tpu.pipeline_mode<synchronous>, transform_indices = @transform_3, window_bounds = array<i64: 128, 128>}, {pipeline_mode = #tpu.pipeline_mode<synchronous>, transform_indices = @transform_4, window_bounds = array<i64: 1, 128>}, {pipeline_mode = #tpu.pipeline_mode<synchronous>, transform_indices = @transform_5, window_bounds = array<i64: 128, 128>}, {pipeline_mode = #tpu.pipeline_mode<synchronous>, transform_indices = @transform_6, window_bounds = array<i64: 1, 128>}, {pipeline_mode = #tpu.pipeline_mode<synchronous>, transform_indices = @transform_7, window_bounds = array<i64: 128, 128>}, {pipeline_mode = #tpu.pipeline_mode<synchronous>, transform_indices = @transform_8, window_bounds = array<i64: 1, 128>}, {pipeline_mode = #tpu.pipeline_mode<synchronous>, transform_indices = @transform_9, window_bounds = array<i64: 128, 128>}, {pipeline_mode = #tpu.pipeline_mode<synchronous>, transform_indices = @transform_10, window_bounds = array<i64: 1, 128>}, {transform_indices = @transform_11, window_bounds = array<i64: 16, 128>}]} {
    %c0 = arith.constant 0 : index
    %c0_0 = arith.constant 0 : index
    %0 = vector.load %arg1[%c0, %c0_0] : memref<16x128xbf16, #tpu.memory_space<vmem>>, vector<16x128xbf16>
    %c0_1 = arith.constant 0 : index
    %c0_2 = arith.constant 0 : index
    %1 = vector.load %arg2[%c0_1, %c0_2] : memref<128x128xbf16, #tpu.memory_space<vmem>>, vector<128x128xbf16>
    %cst = arith.constant dense<0.000000e+00> : vector<16x128xf32>
    %2 = tpu.matmul %0, %1, %cst {dimension_numbers = #tpu.dot_dimension_numbers<[1], [0], [0], [1], [0, 0, 1, 1], [], []>} : vector<16x128xbf16>, vector<128x128xbf16>, vector<16x128xf32> -> vector<16x128xf32>
    %c0_3 = arith.constant 0 : index
    %c0_4 = arith.constant 0 : index
    %3 = vector.load %arg3[%c0_3, %c0_4] : memref<1x128xf32, #tpu.memory_space<vmem>>, vector<1x128xf32>
    %4 = vector.broadcast %3 : vector<1x128xf32> to vector<16x128xf32>
    %5 = arith.addf %2, %4 : vector<16x128xf32>
    %cst_5 = arith.constant 0.000000e+00 : f32
    %6 = vector.broadcast %cst_5 : f32 to vector<16x128xf32>
    %7 = arith.maximumf %5, %6 : vector<16x128xf32>
    %8 = arith.truncf %7 : vector<16x128xf32> to vector<16x128xbf16>
    %c0_6 = arith.constant 0 : index
    %c0_7 = arith.constant 0 : index
    %9 = vector.load %arg4[%c0_6, %c0_7] : memref<128x128xbf16, #tpu.memory_space<vmem>>, vector<128x128xbf16>
    %cst_8 = arith.constant dense<0.000000e+00> : vector<16x128xf32>
    %10 = tpu.matmul %8, %9, %cst_8 {dimension_numbers = #tpu.dot_dimension_numbers<[1], [0], [0], [1], [0, 0, 1, 1], [], []>} : vector<16x128xbf16>, vector<128x128xbf16>, vector<16x128xf32> -> vector<16x128xf32>
    %c0_9 = arith.constant 0 : index
    %c0_10 = arith.constant 0 : index
    %11 = vector.load %arg5[%c0_9, %c0_10] : memref<1x128xf32, #tpu.memory_space<vmem>>, vector<1x128xf32>
    %12 = vector.broadcast %11 : vector<1x128xf32> to vector<16x128xf32>
    %13 = arith.addf %10, %12 : vector<16x128xf32>
    %cst_11 = arith.constant 0.000000e+00 : f32
    %14 = vector.broadcast %cst_11 : f32 to vector<16x128xf32>
    %15 = arith.maximumf %13, %14 : vector<16x128xf32>
    %16 = arith.truncf %15 : vector<16x128xf32> to vector<16x128xbf16>
    %c0_12 = arith.constant 0 : index
    %c0_13 = arith.constant 0 : index
    %17 = vector.load %arg6[%c0_12, %c0_13] : memref<128x128xbf16, #tpu.memory_space<vmem>>, vector<128x128xbf16>
    %cst_14 = arith.constant dense<0.000000e+00> : vector<16x128xf32>
    %18 = tpu.matmul %16, %17, %cst_14 {dimension_numbers = #tpu.dot_dimension_numbers<[1], [0], [0], [1], [0, 0, 1, 1], [], []>} : vector<16x128xbf16>, vector<128x128xbf16>, vector<16x128xf32> -> vector<16x128xf32>
    %c0_15 = arith.constant 0 : index
    %c0_16 = arith.constant 0 : index
    %19 = vector.load %arg7[%c0_15, %c0_16] : memref<1x128xf32, #tpu.memory_space<vmem>>, vector<1x128xf32>
    %20 = vector.broadcast %19 : vector<1x128xf32> to vector<16x128xf32>
    %21 = arith.addf %18, %20 : vector<16x128xf32>
    %cst_17 = arith.constant 0.000000e+00 : f32
    %22 = vector.broadcast %cst_17 : f32 to vector<16x128xf32>
    %23 = arith.maximumf %21, %22 : vector<16x128xf32>
    %24 = arith.truncf %23 : vector<16x128xf32> to vector<16x128xbf16>
    %c0_18 = arith.constant 0 : index
    %c0_19 = arith.constant 0 : index
    %25 = vector.load %arg8[%c0_18, %c0_19] : memref<128x128xbf16, #tpu.memory_space<vmem>>, vector<128x128xbf16>
    %cst_20 = arith.constant dense<0.000000e+00> : vector<16x128xf32>
    %26 = tpu.matmul %24, %25, %cst_20 {dimension_numbers = #tpu.dot_dimension_numbers<[1], [0], [0], [1], [0, 0, 1, 1], [], []>} : vector<16x128xbf16>, vector<128x128xbf16>, vector<16x128xf32> -> vector<16x128xf32>
    %c0_21 = arith.constant 0 : index
    %c0_22 = arith.constant 0 : index
    %27 = vector.load %arg9[%c0_21, %c0_22] : memref<1x128xf32, #tpu.memory_space<vmem>>, vector<1x128xf32>
    %28 = vector.broadcast %27 : vector<1x128xf32> to vector<16x128xf32>
    %29 = arith.addf %26, %28 : vector<16x128xf32>
    %cst_23 = arith.constant 0.000000e+00 : f32
    %30 = vector.broadcast %cst_23 : f32 to vector<16x128xf32>
    %31 = arith.maximumf %29, %30 : vector<16x128xf32>
    %32 = arith.truncf %31 : vector<16x128xf32> to vector<16x128xbf16>
    %c0_24 = arith.constant 0 : index
    %c0_25 = arith.constant 0 : index
    %33 = vector.load %arg10[%c0_24, %c0_25] : memref<128x128xbf16, #tpu.memory_space<vmem>>, vector<128x128xbf16>
    %cst_26 = arith.constant dense<0.000000e+00> : vector<16x128xf32>
    %34 = tpu.matmul %32, %33, %cst_26 {dimension_numbers = #tpu.dot_dimension_numbers<[1], [0], [0], [1], [0, 0, 1, 1], [], []>} : vector<16x128xbf16>, vector<128x128xbf16>, vector<16x128xf32> -> vector<16x128xf32>
    %c0_27 = arith.constant 0 : index
    %c0_28 = arith.constant 0 : index
    %35 = vector.load %arg11[%c0_27, %c0_28] : memref<1x128xf32, #tpu.memory_space<vmem>>, vector<1x128xf32>
    %36 = vector.broadcast %35 : vector<1x128xf32> to vector<16x128xf32>
    %37 = arith.addf %34, %36 : vector<16x128xf32>
    %cst_29 = arith.constant dense<0xFF800000> : vector<16xf32>
    %38 = vector.multi_reduction <maximumf>, %37, %cst_29 [1] : vector<16x128xf32> to vector<16xf32>
    %39 = vector.shape_cast %38 : vector<16xf32> to vector<16x1xf32>
    %40 = vector.broadcast %39 : vector<16x1xf32> to vector<16x128xf32>
    %41 = arith.subf %37, %40 : vector<16x128xf32>
    %42 = math.exp %41 : vector<16x128xf32>
    %cst_30 = arith.constant dense<0.000000e+00> : vector<16xf32>
    %43 = vector.multi_reduction <add>, %42, %cst_30 [1] : vector<16x128xf32> to vector<16xf32>
    %44 = vector.shape_cast %43 : vector<16xf32> to vector<16x1xf32>
    %45 = math.log %44 : vector<16x1xf32>
    %46 = vector.broadcast %45 : vector<16x1xf32> to vector<16x128xf32>
    %47 = arith.subf %41, %46 : vector<16x128xf32>
    %c0_31 = arith.constant 0 : index
    %c0_32 = arith.constant 0 : index
    %48 = vector.load %arg12[%c0_31, %c0_32] : memref<16x128xf32, #tpu.memory_space<vmem>>, vector<16x128xf32>
    tpu.vector_store %arg12[%c0_31, %c0_32], %47 {strides = array<i32>} : memref<16x128xf32, #tpu.memory_space<vmem>>, vector<16x128xf32>,
    return
  }
  func.func @transform_0(%arg0: i32) -> (i32, i32) {
    %c0_i32 = arith.constant 0 : i32
    %c0_i32_0 = arith.constant 0 : i32
    return %arg0, %c0_i32 : i32, i32
  }
  func.func @transform_1(%arg0: i32) -> (i32, i32) {
    %c0_i32 = arith.constant 0 : i32
    %c0_i32_0 = arith.constant 0 : i32
    %c0_i32_1 = arith.constant 0 : i32
    return %c0_i32, %c0_i32_0 : i32, i32
  }
  func.func @transform_2(%arg0: i32) -> (i32, i32) {
    %c0_i32 = arith.constant 0 : i32
    %c0_i32_0 = arith.constant 0 : i32
    %c0_i32_1 = arith.constant 0 : i32
    return %c0_i32, %c0_i32_0 : i32, i32
  }
  func.func @transform_3(%arg0: i32) -> (i32, i32) {
    %c0_i32 = arith.constant 0 : i32
    %c0_i32_0 = arith.constant 0 : i32
    %c0_i32_1 = arith.constant 0 : i32
    return %c0_i32, %c0_i32_0 : i32, i32
  }
  func.func @transform_4(%arg0: i32) -> (i32, i32) {
    %c0_i32 = arith.constant 0 : i32
    %c0_i32_0 = arith.constant 0 : i32
    %c0_i32_1 = arith.constant 0 : i32
    return %c0_i32, %c0_i32_0 : i32, i32
  }
  func.func @transform_5(%arg0: i32) -> (i32, i32) {
    %c0_i32 = arith.constant 0 : i32
    %c0_i32_0 = arith.constant 0 : i32
    %c0_i32_1 = arith.constant 0 : i32
    return %c0_i32, %c0_i32_0 : i32, i32
  }
  func.func @transform_6(%arg0: i32) -> (i32, i32) {
    %c0_i32 = arith.constant 0 : i32
    %c0_i32_0 = arith.constant 0 : i32
    %c0_i32_1 = arith.constant 0 : i32
    return %c0_i32, %c0_i32_0 : i32, i32
  }
  func.func @transform_7(%arg0: i32) -> (i32, i32) {
    %c0_i32 = arith.constant 0 : i32
    %c0_i32_0 = arith.constant 0 : i32
    %c0_i32_1 = arith.constant 0 : i32
    return %c0_i32, %c0_i32_0 : i32, i32
  }
  func.func @transform_8(%arg0: i32) -> (i32, i32) {
    %c0_i32 = arith.constant 0 : i32
    %c0_i32_0 = arith.constant 0 : i32
    %c0_i32_1 = arith.constant 0 : i32
    return %c0_i32, %c0_i32_0 : i32, i32
  }
  func.func @transform_9(%arg0: i32) -> (i32, i32) {
    %c0_i32 = arith.constant 0 : i32
    %c0_i32_0 = arith.constant 0 : i32
    %c0_i32_1 = arith.constant 0 : i32
    return %c0_i32, %c0_i32_0 : i32, i32
  }
  func.func @transform_10(%arg0: i32) -> (i32, i32) {
    %c0_i32 = arith.constant 0 : i32
    %c0_i32_0 = arith.constant 0 : i32
    %c0_i32_1 = arith.constant 0 : i32
    return %c0_i32, %c0_i32_0 : i32, i32
  }
  func.func @transform_11(%arg0: i32) -> (i32, i32) {
    %c0_i32 = arith.constant 0 : i32
    %c0_i32_0 = arith.constant 0 : i32
    return %arg0, %c0_i32 : i32, i32
  }
}

</mosaic_0001>

<llo_original>
// kernel: tpu_custom_call.1
$region0: #{tpu_custom_call.1}
  #allocation0 [shape = 'u32[]', space=smem, size = 0x4, offset = 0x4, fixed_abs, tag = 'smem constant byte address 0x4 - core index']
  #allocation1 [shape = 'u32[144,128]{1,0:T(1,128)}', space=vmem, size = 0x12000, scoped, tag = 'internal scratch']
  %s0 = inlined_call_operand.hbm [shape: bf16[16,128], index: 0, kind: input, shape index: {}]
  %s1 = inlined_call_operand.hbm [shape: bf16[128,128], index: 1, kind: input, shape index: {}]
  %s2 = inlined_call_operand.vmem [shape: f32[1,128], index: 2, kind: input, shape index: {}]
  %s3 = inlined_call_operand.hbm [shape: bf16[128,128], index: 3, kind: input, shape index: {}]
  %s4 = inlined_call_operand.vmem [shape: f32[1,128], index: 4, kind: input, shape index: {}]
  %s5 = inlined_call_operand.hbm [shape: bf16[128,128], index: 5, kind: input, shape index: {}]
  %s6 = inlined_call_operand.vmem [shape: f32[1,128], index: 6, kind: input, shape index: {}]
  %s7 = inlined_call_operand.hbm [shape: bf16[128,128], index: 7, kind: input, shape index: {}]
  %s8 = inlined_call_operand.vmem [shape: f32[1,128], index: 8, kind: input, shape index: {}]
  %s9 = inlined_call_operand.hbm [shape: bf16[128,128], index: 9, kind: input, shape index: {}]
  %s10 = inlined_call_operand.vmem [shape: f32[1,128], index: 10, kind: input, shape index: {}]
  %s11 = inlined_call_operand.hbm [shape: f32[16,128], index: 11, kind: output, shape index: {}]
  %s12 = sld [smem:[#allocation0]]
  $region78: #{tpu_custom_call.1} parent=0
    _
  %s14 = ssub.s32 1, %s12
  %s15 = scalar_select 0, %s14, %s12
  $region1: #{tpu_custom_call.1} parent=0
    #allocation2 [shape = 'u8[4096]{0}', space=vmem, size = 0x1000, scoped, tag = 'input window, operand 0, single buffered']
    #allocation3 [shape = 's32[1]{0}', space=sflag, size = 0x4, scoped, tag = 'scoped memory for tpu_custom_call.1']
    #allocation4 [shape = 's32[1]{0}', space=sflag, size = 0x4, scoped, tag = 'scoped memory for tpu_custom_call.1']
    #allocation5 [shape = 'u8[32768]{0}', space=vmem, size = 0x8000, scoped, tag = 'input window, operand 1, single buffered']
    #allocation6 [shape = 's32[1]{0}', space=sflag, size = 0x4, scoped, tag = 'scoped memory for tpu_custom_call.1']
    #allocation7 [shape = 'u8[32768]{0}', space=vmem, size = 0x8000, scoped, tag = 'input window, operand 3, single buffered']
    #allocation8 [shape = 'u8[32768]{0}', space=vmem, size = 0x8000, scoped, tag = 'input window, operand 5, single buffered']
    #allocation9 [shape = 's32[1]{0}', space=sflag, size = 0x4, scoped, tag = 'scoped memory for tpu_custom_call.1']
    #allocation10 [shape = 'u8[32768]{0}', space=vmem, size = 0x8000, scoped, tag = 'input window, operand 7, single buffered']
    #allocation11 [shape = 'u8[32768]{0}', space=vmem, size = 0x8000, scoped, tag = 'input window, operand 9, single buffered']
    #allocation12 [shape = 's32[1]{0}', space=sflag, size = 0x4, scoped, tag = 'scoped memory for tpu_custom_call.1']
    #allocation13 [shape = 'u8[8192]{0}', space=vmem, size = 0x2000, scoped, tag = 'output window, operand 0, single buffered']
    %16 = vsyncpa [#allocation3], 0
    %17 = vsyncpa [#allocation6], 0
    %18 = vsyncpa [#allocation9], 0
    %19 = vsyncpa [#allocation12], 0
    %20 = vsyncpa [#allocation4], 0
    // Predicated region
    $region2: #{tpu_custom_call.1} parent=1 // pred_check
      _
    $region3: #{tpu_custom_call.1} parent=1 // pred_check_branch
      %22 = sbr.rel (0) target = $region5
    $region4: #{tpu_custom_call.1} parent=1 // pred_region
      %s24 = ssub.s32 128, 128
      %25 = vsyncadd [#allocation3], %s24
      %s26 = sshll.u32 [#allocation2], 4
      %s27 = int_to_ptr.vmem [resolvable:$true] %s26
      %32 = dma.hbm_to_vmem [thread:$0]  %s0, 128, %s27, [#allocation3], 64, 64, 4
    $region5: #{tpu_custom_call.1} parent=1 // pred_fallthru
      _
    // Predicated region
    $region6: #{tpu_custom_call.1} parent=1 // pred_check
      _
    $region7: #{tpu_custom_call.1} parent=1 // pred_check_branch
      %34 = sbr.rel (0) target = $region9
    $region8: #{tpu_custom_call.1} parent=1 // pred_region
      %s36 = ssub.s32 1024, 1024
      %37 = vsyncadd [#allocation6], %s36
      %s38 = sshll.u32 [#allocation5], 4
      %s39 = int_to_ptr.vmem [resolvable:$true] %s38
      %44 = dma.hbm_to_vmem [thread:$0]  %s1, 1024, %s39, [#allocation6], 64, 64, 4
    $region9: #{tpu_custom_call.1} parent=1 // pred_fallthru
      _
    // Predicated region
    $region10: #{tpu_custom_call.1} parent=1 // pred_check
      _
    $region11: #{tpu_custom_call.1} parent=1 // pred_check_branch
      %46 = sbr.rel (0) target = $region13
    $region12: #{tpu_custom_call.1} parent=1 // pred_region
      _
    $region13: #{tpu_custom_call.1} parent=1 // pred_fallthru
      _
    // Predicated region
    $region14: #{tpu_custom_call.1} parent=1 // pred_check
      _
    $region15: #{tpu_custom_call.1} parent=1 // pred_check_branch
      %48 = sbr.rel (0) target = $region17
    $region16: #{tpu_custom_call.1} parent=1 // pred_region
      %s50 = ssub.s32 1024, 1024
      %51 = vsyncadd [#allocation6], %s50
      %s52 = sshll.u32 [#allocation7], 4
      %s53 = int_to_ptr.vmem [resolvable:$true] %s52
      %58 = dma.hbm_to_vmem [thread:$0]  %s3, 1024, %s53, [#allocation6], 64, 64, 4
    $region17: #{tpu_custom_call.1} parent=1 // pred_fallthru
      _
    // Predicated region
    $region18: #{tpu_custom_call.1} parent=1 // pred_check
      _
    $region19: #{tpu_custom_call.1} parent=1 // pred_check_branch
      %60 = sbr.rel (0) target = $region21
    $region20: #{tpu_custom_call.1} parent=1 // pred_region
      _
    $region21: #{tpu_custom_call.1} parent=1 // pred_fallthru
      _
    // Predicated region
    $region22: #{tpu_custom_call.1} parent=1 // pred_check
      _
    $region23: #{tpu_custom_call.1} parent=1 // pred_check_branch
      %62 = sbr.rel (0) target = $region25
    $region24: #{tpu_custom_call.1} parent=1 // pred_region
      %s64 = ssub.s32 1024, 1024
      %65 = vsyncadd [#allocation9], %s64
      %s66 = sshll.u32 [#allocation8], 4
      %s67 = int_to_ptr.vmem [resolvable:$true] %s66
      %72 = dma.hbm_to_vmem [thread:$0]  %s5, 1024, %s67, [#allocation9], 64, 64, 4
    $region25: #{tpu_custom_call.1} parent=1 // pred_fallthru
      _
    // Predicated region
    $region26: #{tpu_custom_call.1} parent=1 // pred_check
      _
    $region27: #{tpu_custom_call.1} parent=1 // pred_check_branch
      %74 = sbr.rel (0) target = $region29
    $region28: #{tpu_custom_call.1} parent=1 // pred_region
      _
    $region29: #{tpu_custom_call.1} parent=1 // pred_fallthru
      _
    // Predicated region
    $region30: #{tpu_custom_call.1} parent=1 // pred_check
      _
    $region31: #{tpu_custom_call.1} parent=1 // pred_check_branch
      %76 = sbr.rel (0) target = $region33
    $region32: #{tpu_custom_call.1} parent=1 // pred_region
      %s78 = ssub.s32 1024, 1024
      %79 = vsyncadd [#allocation9], %s78
      %s80 = sshll.u32 [#allocation10], 4
      %s81 = int_to_ptr.vmem [resolvable:$true] %s80
      %86 = dma.hbm_to_vmem [thread:$0]  %s7, 1024, %s81, [#allocation9], 64, 64, 4
    $region33: #{tpu_custom_call.1} parent=1 // pred_fallthru
      _
    // Predicated region
    $region34: #{tpu_custom_call.1} parent=1 // pred_check
      _
    $region35: #{tpu_custom_call.1} parent=1 // pred_check_branch
      %88 = sbr.rel (0) target = $region37
    $region36: #{tpu_custom_call.1} parent=1 // pred_region
      _
    $region37: #{tpu_custom_call.1} parent=1 // pred_fallthru
      _
    // Predicated region
    $region38: #{tpu_custom_call.1} parent=1 // pred_check
      _
    $region39: #{tpu_custom_call.1} parent=1 // pred_check_branch
      %90 = sbr.rel (0) target = $region41
    $region40: #{tpu_custom_call.1} parent=1 // pred_region
      %s92 = ssub.s32 1024, 1024
      %93 = vsyncadd [#allocation12], %s92
      %s94 = sshll.u32 [#allocation11], 4
      %s95 = int_to_ptr.vmem [resolvable:$true] %s94
      %100 = dma.hbm_to_vmem [thread:$0]  %s9, 1024, %s95, [#allocation12], 64, 64, 4
    $region41: #{tpu_custom_call.1} parent=1 // pred_fallthru
      _
    // Predicated region
    $region42: #{tpu_custom_call.1} parent=1 // pred_check
      _
    $region43: #{tpu_custom_call.1} parent=1 // pred_check_branch
      %102 = sbr.rel (0) target = $region45
    $region44: #{tpu_custom_call.1} parent=1 // pred_region
      _
    $region45: #{tpu_custom_call.1} parent=1 // pred_fallthru
      _
    // Predicated region
    $region46: #{tpu_custom_call.1} parent=1 // pred_check
      _
    $region47: #{tpu_custom_call.1} parent=1 // pred_check_branch
      %104 = sbr.rel (0) target = $region49
    $region48: #{tpu_custom_call.1} parent=1 // pred_region
      %105 = dma.done [#allocation3], 128
    $region49: #{tpu_custom_call.1} parent=1 // pred_fallthru
      _
    // Predicated region
    $region50: #{tpu_custom_call.1} parent=1 // pred_check
      _
    $region51: #{tpu_custom_call.1} parent=1 // pred_check_branch
      %107 = sbr.rel (0) target = $region53
    $region52: #{tpu_custom_call.1} parent=1 // pred_region
      %108 = dma.done [#allocation6], 1024
    $region53: #{tpu_custom_call.1} parent=1 // pred_fallthru
      _
    // Predicated region
    $region54: #{tpu_custom_call.1} parent=1 // pred_check
      _
    $region55: #{tpu_custom_call.1} parent=1 // pred_check_branch
      %110 = sbr.rel (0) target = $region57
    $region56: #{tpu_custom_call.1} parent=1 // pred_region
      %111 = dma.done [#allocation6], 1024
    $region57: #{tpu_custom_call.1} parent=1 // pred_fallthru
      _
    // Predicated region
    $region58: #{tpu_custom_call.1} parent=1 // pred_check
      _
    $region59: #{tpu_custom_call.1} parent=1 // pred_check_branch
      %113 = sbr.rel (0) target = $region61
    $region60: #{tpu_custom_call.1} parent=1 // pred_region
      %114 = dma.done [#allocation9], 1024
    $region61: #{tpu_custom_call.1} parent=1 // pred_fallthru
      _
    // Predicated region
    $region62: #{tpu_custom_call.1} parent=1 // pred_check
      _
    $region63: #{tpu_custom_call.1} parent=1 // pred_check_branch
      %116 = sbr.rel (0) target = $region65
    $region64: #{tpu_custom_call.1} parent=1 // pred_region
      %117 = dma.done [#allocation9], 1024
    $region65: #{tpu_custom_call.1} parent=1 // pred_fallthru
      _
    // Predicated region
    $region66: #{tpu_custom_call.1} parent=1 // pred_check
      _
    $region67: #{tpu_custom_call.1} parent=1 // pred_check_branch
      %119 = sbr.rel (0) target = $region69
    $region68: #{tpu_custom_call.1} parent=1 // pred_region
      %120 = dma.done [#allocation12], 1024
    $region69: #{tpu_custom_call.1} parent=1 // pred_fallthru
      _
    %v122 = vld [vmem:[#allocation2] sm:$0xf]
    %v123 = vld [vmem:[#allocation2 + $0x4] sm:$0xf]
    %v124 = vld [vmem:[#allocation5] sm:$0xf]
    %v125 = vld [vmem:[#allocation5 + $0x4] sm:$0xf]
    %v126 = vld [vmem:[#allocation5 + $0x8] sm:$0xf]
    %v127 = vld [vmem:[#allocation5 + $0xc] sm:$0xf]
    %v128 = vld [vmem:[#allocation5 + $0x10] sm:$0xf]
    %v129 = vld [vmem:[#allocation5 + $0x14] sm:$0xf]
    %v130 = vld [vmem:[#allocation5 + $0x18] sm:$0xf]
    %v131 = vld [vmem:[#allocation5 + $0x1c] sm:$0xf]
    %v132 = vld [vmem:[#allocation5 + $0x20] sm:$0xf]
    %v133 = vld [vmem:[#allocation5 + $0x24] sm:$0xf]
    %v134 = vld [vmem:[#allocation5 + $0x28] sm:$0xf]
    %v135 = vld [vmem:[#allocation5 + $0x2c] sm:$0xf]
    %v136 = vld [vmem:[#allocation5 + $0x30] sm:$0xf]
    %v137 = vld [vmem:[#allocation5 + $0x34] sm:$0xf]
    %v138 = vld [vmem:[#allocation5 + $0x38] sm:$0xf]
    %v139 = vld [vmem:[#allocation5 + $0x3c] sm:$0xf]
    %v140 = vld [vmem:[%s2] sm:$0x1]
    %v142 = vlaneseq
    %v143 = vshrl.u32 %v142, 7
    %v144 = vsub.s32 0, %v143
    %v145 = vrot.slane %v140, %v144
    %v149 = vunpack.c.l.b16 %v122
    %v150 = vunpack.c.l.b16 %v123
    %v151 = vpack.c.b16 %v150, %v149
    %v169 = vunpack.c.l.b16 %v124
    %v170 = vunpack.c.l.b16 %v125
    %v171 = vunpack.c.l.b16 %v126
    %v172 = vunpack.c.l.b16 %v127
    %v173 = vunpack.c.l.b16 %v128
    %v174 = vunpack.c.l.b16 %v129
    %v175 = vunpack.c.l.b16 %v130
    %v176 = vunpack.c.l.b16 %v131
    %v177 = vunpack.c.l.b16 %v132
    %v178 = vunpack.c.l.b16 %v133
    %v179 = vunpack.c.l.b16 %v134
    %v180 = vunpack.c.l.b16 %v135
    %v181 = vunpack.c.l.b16 %v136
    %v182 = vunpack.c.l.b16 %v137
    %v183 = vunpack.c.l.b16 %v138
    %v184 = vunpack.c.l.b16 %v139
    %v185 = vpack.c.b16 %v170, %v169
    %v186 = vpack.c.b16 %v172, %v171
    %v187 = vpack.c.b16 %v174, %v173
    %v188 = vpack.c.b16 %v176, %v175
    %v189 = vpack.c.b16 %v178, %v177
    %v190 = vpack.c.b16 %v180, %v179
    %v191 = vpack.c.b16 %v182, %v181
    %v192 = vpack.c.b16 %v184, %v183
    %201 = vmatprep.subr.bf16.mxu0 0
    %202 = vmatpush1.bf16.msra.mxu0 %v192
    %203 = vmatprep.subr.bf16.mxu0 0
    %204 = vmatpush1.bf16.msra.mxu0 %v191
    %205 = vmatprep.subr.bf16.mxu0 0
    %206 = vmatpush1.bf16.msra.mxu0 %v190
    %207 = vmatprep.subr.bf16.mxu0 0
    %208 = vmatpush1.bf16.msra.mxu0 %v189
    %209 = vmatprep.subr.bf16.mxu0 0
    %210 = vmatpush1.bf16.msra.mxu0 %v188
    %211 = vmatprep.subr.bf16.mxu0 0
    %212 = vmatpush1.bf16.msra.mxu0 %v187
    %213 = vmatprep.subr.bf16.mxu0 0
    %214 = vmatpush1.bf16.msra.mxu0 %v186
    %215 = vmatprep.subr.bf16.mxu0 0
    %216 = vmatpush1.bf16.msra.mxu0 %v185
    %217 = vmatprep.subr.bf16.mxu0 0
    %218 = vmatpush2.bf16.msra.mxu0 0
    %219 = vmatprep.subr.bf16.mxu0 0
    %220 = vmatpush2.bf16.msra.mxu0 0
    %221 = vmatprep.subr.bf16.mxu0 0
    %222 = vmatpush2.bf16.msra.mxu0 0
    %223 = vmatprep.subr.bf16.mxu0 0
    %224 = vmatpush2.bf16.msra.mxu0 0
    %225 = vmatprep.subr.bf16.mxu0 0
    %226 = vmatpush2.bf16.msra.mxu0 0
    %227 = vmatprep.subr.bf16.mxu0 0
    %228 = vmatpush2.bf16.msra.mxu0 0
    %229 = vmatprep.subr.bf16.mxu0 0
    %230 = vmatpush2.bf16.msra.mxu0 0
    %231 = vmatprep.subr.bf16.mxu0 0
    %232 = vmatpush2.bf16.msra.mxu0 0
    %233 = vmatprep.mubr.bf16.mxu0 0
    %234 = vmatmul.mubr.bf16.gmra.mxu0 %v151
    %v235 = vpop.f32.mrf.mxu0
    %v236 = vadd.f32 %v145, %v235
    %v237 = vpop.f32.mrf.mxu0
    %v238 = vpop.f32.mrf.mxu0
    %v239 = vadd.f32 %v145, %v238
    %v240 = vpop.f32.mrf.mxu0
    %241 = vdwg.mxu0
    %v242 = vmax.f32 %v236, 0.0
    %v243 = vmax.f32 %v239, 0.0
    %v244 = vpack.c.bf16 %v243, %v242
    %v245 = vld [vmem:[#allocation7] sm:$0xf]
    %v246 = vld [vmem:[#allocation7 + $0x4] sm:$0xf]
    %v247 = vld [vmem:[#allocation7 + $0x8] sm:$0xf]
    %v248 = vld [vmem:[#allocation7 + $0xc] sm:$0xf]
    %v249 = vld [vmem:[#allocation7 + $0x10] sm:$0xf]
    %v250 = vld [vmem:[#allocation7 + $0x14] sm:$0xf]
    %v251 = vld [vmem:[#allocation7 + $0x18] sm:$0xf]
    %v252 = vld [vmem:[#allocation7 + $0x1c] sm:$0xf]
    %v253 = vld [vmem:[#allocation7 + $0x20] sm:$0xf]
    %v254 = vld [vmem:[#allocation7 + $0x24] sm:$0xf]
    %v255 = vld [vmem:[#allocation7 + $0x28] sm:$0xf]
    %v256 = vld [vmem:[#allocation7 + $0x2c] sm:$0xf]
    %v257 = vld [vmem:[#allocation7 + $0x30] sm:$0xf]
    %v258 = vld [vmem:[#allocation7 + $0x34] sm:$0xf]
    %v259 = vld [vmem:[#allocation7 + $0x38] sm:$0xf]
    %v260 = vld [vmem:[#allocation7 + $0x3c] sm:$0xf]
    %v261 = vld [vmem:[%s4] sm:$0x1]
    %v263 = vlaneseq
    %v264 = vshrl.u32 %v263, 7
    %v265 = vsub.s32 0, %v264
    %v266 = vrot.slane %v261, %v265
    %v284 = vunpack.c.l.b16 %v245
    %v285 = vunpack.c.l.b16 %v246
    %v286 = vunpack.c.l.b16 %v247
    %v287 = vunpack.c.l.b16 %v248
    %v288 = vunpack.c.l.b16 %v249
    %v289 = vunpack.c.l.b16 %v250
    %v290 = vunpack.c.l.b16 %v251
    %v291 = vunpack.c.l.b16 %v252
    %v292 = vunpack.c.l.b16 %v253
    %v293 = vunpack.c.l.b16 %v254
    %v294 = vunpack.c.l.b16 %v255
    %v295 = vunpack.c.l.b16 %v256
    %v296 = vunpack.c.l.b16 %v257
    %v297 = vunpack.c.l.b16 %v258
    %v298 = vunpack.c.l.b16 %v259
    %v299 = vunpack.c.l.b16 %v260
    %v300 = vpack.c.b16 %v285, %v284
    %v301 = vpack.c.b16 %v287, %v286
    %v302 = vpack.c.b16 %v289, %v288
    %v303 = vpack.c.b16 %v291, %v290
    %v304 = vpack.c.b16 %v293, %v292
    %v305 = vpack.c.b16 %v295, %v294
    %v306 = vpack.c.b16 %v297, %v296
    %v307 = vpack.c.b16 %v299, %v298
    %316 = vmatprep.subr.bf16.mxu0 0
    %317 = vmatpush1.bf16.msra.mxu0 %v307
    %318 = vmatprep.subr.bf16.mxu0 0
    %319 = vmatpush1.bf16.msra.mxu0 %v306
    %320 = vmatprep.subr.bf16.mxu0 0
    %321 = vmatpush1.bf16.msra.mxu0 %v305
    %322 = vmatprep.subr.bf16.mxu0 0
    %323 = vmatpush1.bf16.msra.mxu0 %v304
    %324 = vmatprep.subr.bf16.mxu0 0
    %325 = vmatpush1.bf16.msra.mxu0 %v303
    %326 = vmatprep.subr.bf16.mxu0 0
    %327 = vmatpush1.bf16.msra.mxu0 %v302
    %328 = vmatprep.subr.bf16.mxu0 0
    %329 = vmatpush1.bf16.msra.mxu0 %v301
    %330 = vmatprep.subr.bf16.mxu0 0
    %331 = vmatpush1.bf16.msra.mxu0 %v300
    %332 = vmatprep.subr.bf16.mxu0 0
    %333 = vmatpush2.bf16.msra.mxu0 0
    %334 = vmatprep.subr.bf16.mxu0 0
    %335 = vmatpush2.bf16.msra.mxu0 0
    %336 = vmatprep.subr.bf16.mxu0 0
    %337 = vmatpush2.bf16.msra.mxu0 0
    %338 = vmatprep.subr.bf16.mxu0 0
    %339 = vmatpush2.bf16.msra.mxu0 0
    %340 = vmatprep.subr.bf16.mxu0 0
    %341 = vmatpush2.bf16.msra.mxu0 0
    %342 = vmatprep.subr.bf16.mxu0 0
    %343 = vmatpush2.bf16.msra.mxu0 0
    %344 = vmatprep.subr.bf16.mxu0 0
    %345 = vmatpush2.bf16.msra.mxu0 0
    %346 = vmatprep.subr.bf16.mxu0 0
    %347 = vmatpush2.bf16.msra.mxu0 0
    %348 = vmatprep.mubr.bf16.mxu0 0
    %349 = vmatmul.mubr.bf16.gmra.mxu0 %v244
    %v350 = vpop.f32.mrf.mxu0
    %v351 = vadd.f32 %v266, %v350
    %v352 = vpop.f32.mrf.mxu0
    %v353 = vpop.f32.mrf.mxu0
    %v354 = vadd.f32 %v266, %v353
    %v355 = vpop.f32.mrf.mxu0
    %356 = vdwg.mxu0
    %v357 = vmax.f32 %v351, 0.0
    %v358 = vmax.f32 %v354, 0.0
    %v359 = vpack.c.bf16 %v358, %v357
    %v360 = vld [vmem:[#allocation8] sm:$0xf]
    %v361 = vld [vmem:[#allocation8 + $0x4] sm:$0xf]
    %v362 = vld [vmem:[#allocation8 + $0x8] sm:$0xf]
    %v363 = vld [vmem:[#allocation8 + $0xc] sm:$0xf]
    %v364 = vld [vmem:[#allocation8 + $0x10] sm:$0xf]
    %v365 = vld [vmem:[#allocation8 + $0x14] sm:$0xf]
    %v366 = vld [vmem:[#allocation8 + $0x18] sm:$0xf]
    %v367 = vld [vmem:[#allocation8 + $0x1c] sm:$0xf]
    %v368 = vld [vmem:[#allocation8 + $0x20] sm:$0xf]
    %v369 = vld [vmem:[#allocation8 + $0x24] sm:$0xf]
    %v370 = vld [vmem:[#allocation8 + $0x28] sm:$0xf]
    %v371 = vld [vmem:[#allocation8 + $0x2c] sm:$0xf]
    %v372 = vld [vmem:[#allocation8 + $0x30] sm:$0xf]
    %v373 = vld [vmem:[#allocation8 + $0x34] sm:$0xf]
    %v374 = vld [vmem:[#allocation8 + $0x38] sm:$0xf]
    %v375 = vld [vmem:[#allocation8 + $0x3c] sm:$0xf]
    %v376 = vld [vmem:[%s6] sm:$0x1]
    %v378 = vlaneseq
    %v379 = vshrl.u32 %v378, 7
    %v380 = vsub.s32 0, %v379
    %v381 = vrot.slane %v376, %v380
    %v399 = vunpack.c.l.b16 %v360
    %v400 = vunpack.c.l.b16 %v361
    %v401 = vunpack.c.l.b16 %v362
    %v402 = vunpack.c.l.b16 %v363
    %v403 = vunpack.c.l.b16 %v364
    %v404 = vunpack.c.l.b16 %v365
    %v405 = vunpack.c.l.b16 %v366
    %v406 = vunpack.c.l.b16 %v367
    %v407 = vunpack.c.l.b16 %v368
    %v408 = vunpack.c.l.b16 %v369
    %v409 = vunpack.c.l.b16 %v370
    %v410 = vunpack.c.l.b16 %v371
    %v411 = vunpack.c.l.b16 %v372
    %v412 = vunpack.c.l.b16 %v373
    %v413 = vunpack.c.l.b16 %v374
    %v414 = vunpack.c.l.b16 %v375
    %v415 = vpack.c.b16 %v400, %v399
    %v416 = vpack.c.b16 %v402, %v401
    %v417 = vpack.c.b16 %v404, %v403
    %v418 = vpack.c.b16 %v406, %v405
    %v419 = vpack.c.b16 %v408, %v407
    %v420 = vpack.c.b16 %v410, %v409
    %v421 = vpack.c.b16 %v412, %v411
    %v422 = vpack.c.b16 %v414, %v413
    %431 = vmatprep.subr.bf16.mxu0 0
    %432 = vmatpush1.bf16.msra.mxu0 %v422
    %433 = vmatprep.subr.bf16.mxu0 0
    %434 = vmatpush1.bf16.msra.mxu0 %v421
    %435 = vmatprep.subr.bf16.mxu0 0
    %436 = vmatpush1.bf16.msra.mxu0 %v420
    %437 = vmatprep.subr.bf16.mxu0 0
    %438 = vmatpush1.bf16.msra.mxu0 %v419
    %439 = vmatprep.subr.bf16.mxu0 0
    %440 = vmatpush1.bf16.msra.mxu0 %v418
    %441 = vmatprep.subr.bf16.mxu0 0
    %442 = vmatpush1.bf16.msra.mxu0 %v417
    %443 = vmatprep.subr.bf16.mxu0 0
    %444 = vmatpush1.bf16.msra.mxu0 %v416
    %445 = vmatprep.subr.bf16.mxu0 0
    %446 = vmatpush1.bf16.msra.mxu0 %v415
    %447 = vmatprep.subr.bf16.mxu0 0
    %448 = vmatpush2.bf16.msra.mxu0 0
    %449 = vmatprep.subr.bf16.mxu0 0
    %450 = vmatpush2.bf16.msra.mxu0 0
    %451 = vmatprep.subr.bf16.mxu0 0
    %452 = vmatpush2.bf16.msra.mxu0 0
    %453 = vmatprep.subr.bf16.mxu0 0
    %454 = vmatpush2.bf16.msra.mxu0 0
    %455 = vmatprep.subr.bf16.mxu0 0
    %456 = vmatpush2.bf16.msra.mxu0 0
    %457 = vmatprep.subr.bf16.mxu0 0
    %458 = vmatpush2.bf16.msra.mxu0 0
    %459 = vmatprep.subr.bf16.mxu0 0
    %460 = vmatpush2.bf16.msra.mxu0 0
    %461 = vmatprep.subr.bf16.mxu0 0
    %462 = vmatpush2.bf16.msra.mxu0 0
    %463 = vmatprep.mubr.bf16.mxu0 0
    %464 = vmatmul.mubr.bf16.gmra.mxu0 %v359
    %v465 = vpop.f32.mrf.mxu0
    %v466 = vadd.f32 %v381, %v465
    %v467 = vpop.f32.mrf.mxu0
    %v468 = vpop.f32.mrf.mxu0
    %v469 = vadd.f32 %v381, %v468
    %v470 = vpop.f32.mrf.mxu0
    %471 = vdwg.mxu0
    %v472 = vmax.f32 %v466, 0.0
    %v473 = vmax.f32 %v469, 0.0
    %v474 = vpack.c.bf16 %v473, %v472
    %v475 = vld [vmem:[#allocation10] sm:$0xf]
    %v476 = vld [vmem:[#allocation10 + $0x4] sm:$0xf]
    %v477 = vld [vmem:[#allocation10 + $0x8] sm:$0xf]
    %v478 = vld [vmem:[#allocation10 + $0xc] sm:$0xf]
    %v479 = vld [vmem:[#allocation10 + $0x10] sm:$0xf]
    %v480 = vld [vmem:[#allocation10 + $0x14] sm:$0xf]
    %v481 = vld [vmem:[#allocation10 + $0x18] sm:$0xf]
    %v482 = vld [vmem:[#allocation10 + $0x1c] sm:$0xf]
    %v483 = vld [vmem:[#allocation10 + $0x20] sm:$0xf]
    %v484 = vld [vmem:[#allocation10 + $0x24] sm:$0xf]
    %v485 = vld [vmem:[#allocation10 + $0x28] sm:$0xf]
    %v486 = vld [vmem:[#allocation10 + $0x2c] sm:$0xf]
    %v487 = vld [vmem:[#allocation10 + $0x30] sm:$0xf]
    %v488 = vld [vmem:[#allocation10 + $0x34] sm:$0xf]
    %v489 = vld [vmem:[#allocation10 + $0x38] sm:$0xf]
    %v490 = vld [vmem:[#allocation10 + $0x3c] sm:$0xf]
    %v491 = vld [vmem:[%s8] sm:$0x1]
    %v493 = vlaneseq
    %v494 = vshrl.u32 %v493, 7
    %v495 = vsub.s32 0, %v494
    %v496 = vrot.slane %v491, %v495
    %v514 = vunpack.c.l.b16 %v475
    %v515 = vunpack.c.l.b16 %v476
    %v516 = vunpack.c.l.b16 %v477
    %v517 = vunpack.c.l.b16 %v478
    %v518 = vunpack.c.l.b16 %v479
    %v519 = vunpack.c.l.b16 %v480
    %v520 = vunpack.c.l.b16 %v481
    %v521 = vunpack.c.l.b16 %v482
    %v522 = vunpack.c.l.b16 %v483
    %v523 = vunpack.c.l.b16 %v484
    %v524 = vunpack.c.l.b16 %v485
    %v525 = vunpack.c.l.b16 %v486
    %v526 = vunpack.c.l.b16 %v487
    %v527 = vunpack.c.l.b16 %v488
    %v528 = vunpack.c.l.b16 %v489
    %v529 = vunpack.c.l.b16 %v490
    %v530 = vpack.c.b16 %v515, %v514
    %v531 = vpack.c.b16 %v517, %v516
    %v532 = vpack.c.b16 %v519, %v518
    %v533 = vpack.c.b16 %v521, %v520
    %v534 = vpack.c.b16 %v523, %v522
    %v535 = vpack.c.b16 %v525, %v524
    %v536 = vpack.c.b16 %v527, %v526
    %v537 = vpack.c.b16 %v529, %v528
    %546 = vmatprep.subr.bf16.mxu0 0
    %547 = vmatpush1.bf16.msra.mxu0 %v537
    %548 = vmatprep.subr.bf16.mxu0 0
    %549 = vmatpush1.bf16.msra.mxu0 %v536
    %550 = vmatprep.subr.bf16.mxu0 0
    %551 = vmatpush1.bf16.msra.mxu0 %v535
    %552 = vmatprep.subr.bf16.mxu0 0
    %553 = vmatpush1.bf16.msra.mxu0 %v534
    %554 = vmatprep.subr.bf16.mxu0 0
    %555 = vmatpush1.bf16.msra.mxu0 %v533
    %556 = vmatprep.subr.bf16.mxu0 0
    %557 = vmatpush1.bf16.msra.mxu0 %v532
    %558 = vmatprep.subr.bf16.mxu0 0
    %559 = vmatpush1.bf16.msra.mxu0 %v531
    %560 = vmatprep.subr.bf16.mxu0 0
    %561 = vmatpush1.bf16.msra.mxu0 %v530
    %562 = vmatprep.subr.bf16.mxu0 0
    %563 = vmatpush2.bf16.msra.mxu0 0
    %564 = vmatprep.subr.bf16.mxu0 0
    %565 = vmatpush2.bf16.msra.mxu0 0
    %566 = vmatprep.subr.bf16.mxu0 0
    %567 = vmatpush2.bf16.msra.mxu0 0
    %568 = vmatprep.subr.bf16.mxu0 0
    %569 = vmatpush2.bf16.msra.mxu0 0
    %570 = vmatprep.subr.bf16.mxu0 0
    %571 = vmatpush2.bf16.msra.mxu0 0
    %572 = vmatprep.subr.bf16.mxu0 0
    %573 = vmatpush2.bf16.msra.mxu0 0
    %574 = vmatprep.subr.bf16.mxu0 0
    %575 = vmatpush2.bf16.msra.mxu0 0
    %576 = vmatprep.subr.bf16.mxu0 0
    %577 = vmatpush2.bf16.msra.mxu0 0
    %578 = vmatprep.mubr.bf16.mxu0 0
    %579 = vmatmul.mubr.bf16.gmra.mxu0 %v474
    %v580 = vpop.f32.mrf.mxu0
    %v581 = vadd.f32 %v496, %v580
    %v582 = vpop.f32.mrf.mxu0
    %v583 = vpop.f32.mrf.mxu0
    %v584 = vadd.f32 %v496, %v583
    %v585 = vpop.f32.mrf.mxu0
    %586 = vdwg.mxu0
    %v587 = vmax.f32 %v581, 0.0
    %v588 = vmax.f32 %v584, 0.0
    %v589 = vpack.c.bf16 %v588, %v587
    %v590 = vld [vmem:[#allocation11] sm:$0xf]
    %v591 = vld [vmem:[#allocation11 + $0x4] sm:$0xf]
    %v592 = vld [vmem:[#allocation11 + $0x8] sm:$0xf]
    %v593 = vld [vmem:[#allocation11 + $0xc] sm:$0xf]
    %v594 = vld [vmem:[#allocation11 + $0x10] sm:$0xf]
    %v595 = vld [vmem:[#allocation11 + $0x14] sm:$0xf]
    %v596 = vld [vmem:[#allocation11 + $0x18] sm:$0xf]
    %v597 = vld [vmem:[#allocation11 + $0x1c] sm:$0xf]
    %v598 = vld [vmem:[#allocation11 + $0x20] sm:$0xf]
    %v599 = vld [vmem:[#allocation11 + $0x24] sm:$0xf]
    %v600 = vld [vmem:[#allocation11 + $0x28] sm:$0xf]
    %v601 = vld [vmem:[#allocation11 + $0x2c] sm:$0xf]
    %v602 = vld [vmem:[#allocation11 + $0x30] sm:$0xf]
    %v603 = vld [vmem:[#allocation11 + $0x34] sm:$0xf]
    %v604 = vld [vmem:[#allocation11 + $0x38] sm:$0xf]
    %v605 = vld [vmem:[#allocation11 + $0x3c] sm:$0xf]
    %v606 = vld [vmem:[%s10] sm:$0x1]
    %v608 = vlaneseq
    %v609 = vshrl.u32 %v608, 7
    %v610 = vsub.s32 0, %v609
    %v611 = vrot.slane %v606, %v610
    %v629 = vunpack.c.l.b16 %v590
    %v630 = vunpack.c.l.b16 %v591
    %v631 = vunpack.c.l.b16 %v592
    %v632 = vunpack.c.l.b16 %v593
    %v633 = vunpack.c.l.b16 %v594
    %v634 = vunpack.c.l.b16 %v595
    %v635 = vunpack.c.l.b16 %v596
    %v636 = vunpack.c.l.b16 %v597
    %v637 = vunpack.c.l.b16 %v598
    %v638 = vunpack.c.l.b16 %v599
    %v639 = vunpack.c.l.b16 %v600
    %v640 = vunpack.c.l.b16 %v601
    %v641 = vunpack.c.l.b16 %v602
    %v642 = vunpack.c.l.b16 %v603
    %v643 = vunpack.c.l.b16 %v604
    %v644 = vunpack.c.l.b16 %v605
    %v645 = vpack.c.b16 %v630, %v629
    %v646 = vpack.c.b16 %v632, %v631
    %v647 = vpack.c.b16 %v634, %v633
    %v648 = vpack.c.b16 %v636, %v635
    %v649 = vpack.c.b16 %v638, %v637
    %v650 = vpack.c.b16 %v640, %v639
    %v651 = vpack.c.b16 %v642, %v641
    %v652 = vpack.c.b16 %v644, %v643
    %661 = vmatprep.subr.bf16.mxu0 0
    %662 = vmatpush1.bf16.msra.mxu0 %v652
    %663 = vmatprep.subr.bf16.mxu0 0
    %664 = vmatpush1.bf16.msra.mxu0 %v651
    %665 = vmatprep.subr.bf16.mxu0 0
    %666 = vmatpush1.bf16.msra.mxu0 %v650
    %667 = vmatprep.subr.bf16.mxu0 0
    %668 = vmatpush1.bf16.msra.mxu0 %v649
    %669 = vmatprep.subr.bf16.mxu0 0
    %670 = vmatpush1.bf16.msra.mxu0 %v648
    %671 = vmatprep.subr.bf16.mxu0 0
    %672 = vmatpush1.bf16.msra.mxu0 %v647
    %673 = vmatprep.subr.bf16.mxu0 0
    %674 = vmatpush1.bf16.msra.mxu0 %v646
    %675 = vmatprep.subr.bf16.mxu0 0
    %676 = vmatpush1.bf16.msra.mxu0 %v645
    %677 = vmatprep.subr.bf16.mxu0 0
    %678 = vmatpush2.bf16.msra.mxu0 0
    %679 = vmatprep.subr.bf16.mxu0 0
    %680 = vmatpush2.bf16.msra.mxu0 0
    %681 = vmatprep.subr.bf16.mxu0 0
    %682 = vmatpush2.bf16.msra.mxu0 0
    %683 = vmatprep.subr.bf16.mxu0 0
    %684 = vmatpush2.bf16.msra.mxu0 0
    %685 = vmatprep.subr.bf16.mxu0 0
    %686 = vmatpush2.bf16.msra.mxu0 0
    %687 = vmatprep.subr.bf16.mxu0 0
    %688 = vmatpush2.bf16.msra.mxu0 0
    %689 = vmatprep.subr.bf16.mxu0 0
    %690 = vmatpush2.bf16.msra.mxu0 0
    %691 = vmatprep.subr.bf16.mxu0 0
    %692 = vmatpush2.bf16.msra.mxu0 0
    %693 = vmatprep.mubr.bf16.mxu0 0
    %694 = vmatmul.mubr.bf16.gmra.mxu0 %v589
    %v695 = vpop.f32.mrf.mxu0
    %v696 = vadd.f32 %v611, %v695
    %v697 = vpop.f32.mrf.mxu0
    %v698 = vpop.f32.mrf.mxu0
    %v699 = vadd.f32 %v611, %v698
    %v700 = vpop.f32.mrf.mxu0
    %701 = vdwg.mxu0
    %702 = vmax.xlane.f32.xlu0 %v696
    %v703 = vpop.xlane.xlu0 %702
    %704 = vmax.xlane.f32.xlu0 %v699
    %v705 = vpop.xlane.xlu0 %704
    %v706 = vsub.f32 %v696, %v703
    %v707 = vsub.f32 %v699, %v705
    %v708 = vmul.f32 %v706, 1.442695
    %v709 = vpow.pop %v708
    %v710 = vmul.f32 %v707, 1.442695
    %v711 = vpow.pop %v710
    %712 = vadd.xlane.f32.xlu0 %v709
    %v713 = vpop.xlane.xlu0 %712
    %714 = vadd.xlane.f32.xlu0 %v711
    %v715 = vpop.xlane.xlu0 %714
    %v716 = vlog2.pop %v713
    %v717 = vmul.f32 %v716, 0.6931472
    %v718 = vlog2.pop %v715
    %v719 = vmul.f32 %v718, 0.6931472
    %v720 = vsub.f32 %v706, %v717
    %v721 = vsub.f32 %v707, %v719
    %722 = vst [vmem:[#allocation13] sm:$0xff] %v720
    %723 = vst [vmem:[#allocation13 + $0x8] sm:$0xff] %v721
    // Predicated region
    $region70: #{tpu_custom_call.1} parent=1 // pred_check
      _
    $region71: #{tpu_custom_call.1} parent=1 // pred_check_branch
      %725 = sbr.rel (0) target = $region73
    $region72: #{tpu_custom_call.1} parent=1 // pred_region
      %s727 = ssub.s32 256, 256
      %728 = vsyncadd [#allocation4], %s727
      %s729 = sshll.u32 [#allocation13], 4
      %s730 = int_to_ptr.vmem [resolvable:$true] %s729
      %735 = dma.vmem_to_hbm [thread:$0]  %s730, 256, %s11, [#allocation4], 128, 128, 8
    $region73: #{tpu_custom_call.1} parent=1 // pred_fallthru
      _
    // Predicated region
    $region74: #{tpu_custom_call.1} parent=1 // pred_check
      _
    $region75: #{tpu_custom_call.1} parent=1 // pred_check_branch
      %737 = sbr.rel (0) target = $region77
    $region76: #{tpu_custom_call.1} parent=1 // pred_region
      %738 = dma.done [#allocation4], 256
    $region77: #{tpu_custom_call.1} parent=1 // pred_fallthru
      _
    %739 = vsyncpa [#allocation3], 1
    %740 = vsyncpa [#allocation6], 1
    %741 = vsyncpa [#allocation9], 1
    %742 = vsyncpa [#allocation12], 1
    %743 = vsyncpa [#allocation4], 1

</llo_original>
